<compile_context>
chip_gen: v7x
topology: tpu7x:2x2x1
jax: 0.10.0
libtpu: 0.0.40
codegen_flags: <defaults>
</compile_context>

<pallas_src>
import functools

import jax
import jax.numpy as jnp
from jax.experimental import pallas as pl
from jax.experimental.pallas import tpu as pltpu


def ccm_kernel(x_ref, wd_ref, bd_ref, w1_ref, w2_ref, o_ref, p_ref, *, hw_true):
    # x_ref : (bt, Cin, HWp)   channel-major block of bt images (HWp % 128 == 0)
    # wd_ref: (Cout, Cin)      1x1-conv weight (PyTorch layout, squeezed)
    # bd_ref: (Cout, 1)        1x1-conv bias (column)
    # w1_ref: (Chid, Cout)     channel-attention fc1 weight (no bias)
    # w2_ref: (Cout, Chid)     channel-attention fc2 weight (no bias)
    # o_ref : (bt, Cout, HWp)  output block (also used to stage t between passes)
    # p_ref : (Cout, 2*bt)     VMEM scratch for pooled avg|max columns
    bt, _, hwp = x_ref.shape
    cout = wd_ref.shape[0]

    wd = wd_ref[...].astype(jnp.float32)                       # VMEM-resident weights
    # Hoisted bias broadcast: JAX does not CSE broadcast_in_dim -> do it once.
    bdb = jnp.broadcast_to(bd_ref[...].astype(jnp.float32), (cout, hwp))

    inv_hw = jnp.float32(1.0 / hw_true)
    padded = hwp != hw_true
    if padded:
        lane = jax.lax.broadcasted_iota(jnp.int32, (cout, hwp), 1)
        valid = lane < hw_true

    # ---- Pass 1: 1x1 conv per image; stage t in the output block; pooled
    # avg/max columns -> scratch.  bt is capped small (<=16) by the wrapper, so
    # a static unroll is fine and every index/slice below stays static.
    for b in range(bt):
        xb = x_ref[b].astype(jnp.float32)                                  # (Cin, HWp)
        t = jnp.dot(wd, xb, preferred_element_type=jnp.float32) + bdb      # (Cout, HWp)
        o_ref[b] = t.astype(o_ref.dtype)                                   # stage t (1 vst)
        if padded:
            s = jnp.sum(jnp.where(valid, t, 0.0), axis=1, keepdims=True)
            m = jnp.max(jnp.where(valid, t, -jnp.inf), axis=1, keepdims=True)
        else:
            s = jnp.sum(t, axis=1, keepdims=True)
            m = jnp.max(t, axis=1, keepdims=True)
        p_ref[:, b:b + 1] = s * inv_hw                                     # avg column
        p_ref[:, bt + b:bt + b + 1] = m                                    # max column

    # ---- Fused channel-attention MLP: one fc1->relu->fc2 pass over all avg &
    # max vectors of the tile (2 tiny matmuls, not 4*bt) and ONE sigmoid.
    h = jnp.maximum(
        jnp.dot(w1_ref[...].astype(jnp.float32), p_ref[...],
                preferred_element_type=jnp.float32), 0.0)                  # (Chid, 2*bt)
    oo = jnp.dot(w2_ref[...].astype(jnp.float32), h,
                 preferred_element_type=jnp.float32)                       # (Cout, 2*bt)
    att = jax.nn.sigmoid(oo[:, :bt] + oo[:, bt:])                          # (Cout, bt)

    # ---- Pass 2: re-read staged t (1 vld) and apply the per-channel gate.
    for b in range(bt):
        t = o_ref[b].astype(jnp.float32)
        o_ref[b] = (t * att[:, b:b + 1]).astype(o_ref.dtype)


def _pick_batch_tile(B, bytes_per_image, *, vmem_budget=8 << 20, min_steps=8,
                     max_unroll=16):
    """Largest bt that (a) keeps double-buffered in+out blocks under the VMEM
    budget, (b) leaves >= min_steps grid steps for DMA/compute overlap (and >=2
    steps so v7x can shard the batch axis over its 2 TensorCores), (c) keeps
    the static unroll small, and (d) divides B."""
    bt_vmem = max(1, int(vmem_budget) // (2 * int(bytes_per_image)))
    bt_steps = max(1, B // min_steps)
    bt = max(1, min(B, bt_vmem, bt_steps, max_unroll))
    while B % bt:
        bt -= 1
    return bt


def ccm_forward(x_nchw, wd, bd, w1, w2, *, batch_tile=None):
    """x_nchw: (B, Cin, H, W);  wd: (Cout, Cin);  bd: (Cout, 1);
    w1: (Chid, Cout);  w2: (Cout, Chid).  Returns (B, Cout, H, W).
    # TODO(synk): if the surrounding model tolerates bf16 activations, pass x /
    # request the output in bf16 to halve HBM traffic (kernel computes in f32)."""
    B, Cin, H, W = x_nchw.shape
    Cout = wd.shape[0]
    Chid = w1.shape[0]
    HW = H * W
    HWp = pl.cdiv(HW, 128) * 128                      # lane-dense last dim
    itemsize = jnp.dtype(x_nchw.dtype).itemsize

    bytes_per_image = (Cin + Cout) * HWp * itemsize
    bt = _pick_batch_tile(B, bytes_per_image) if batch_tile is None else batch_tile
    assert B % bt == 0, "batch must be divisible by the batch tile"

    # Free reshape only (no NCHW<->NHWC transposes); pad HW to a multiple of 128
    # so input loads and output stores are unmasked full-lane accesses.
    x_r = x_nchw.reshape(B, Cin, HW)
    if HWp != HW:
        x_r = jnp.pad(x_r, ((0, 0), (0, 0), (0, HWp - HW)))

    # Explicit VMEM budget: double-buffered in+out blocks + headroom, capped well
    # under the smallest physical VMEM (64 MiB on v7x).
    block_bytes = 2 * bt * (Cin + Cout) * HWp * itemsize
    vmem_limit = int(min(max(2 * block_bytes + (1 << 20), 16 << 20), 48 << 20))

    kernel = functools.partial(ccm_kernel, hw_true=HW)
    out = pl.pallas_call(
        kernel,
        out_shape=jax.ShapeDtypeStruct((B, Cout, HWp), x_nchw.dtype),
        grid=(B // bt,),
        in_specs=[
            pl.BlockSpec((bt, Cin, HWp), lambda i: (i, 0, 0)),
            pl.BlockSpec((Cout, Cin), lambda i: (0, 0)),
            pl.BlockSpec((Cout, 1), lambda i: (0, 0)),
            pl.BlockSpec((Chid, Cout), lambda i: (0, 0)),
            pl.BlockSpec((Cout, Chid), lambda i: (0, 0)),
        ],
        out_specs=pl.BlockSpec((bt, Cout, HWp), lambda i: (i, 0, 0)),
        scratch_shapes=[pltpu.VMEM((Cout, 2 * bt), jnp.float32)],
        compiler_params=pltpu.CompilerParams(
            dimension_semantics=("parallel",),
            vmem_limit_bytes=vmem_limit,
        ),
    )(x_r, wd, bd, w1, w2)

    if HWp != HW:
        out = out[:, :, :HW]
    return out.reshape(B, Cout, H, W)


def ccm_reference(x_nchw, wd, bd, w1, w2):
    """Pure-JAX reference matching the PyTorch forward (same weight layouts)."""
    t = jnp.einsum("oc,bchw->bohw", wd, x_nchw, precision="highest")
    t = t + bd[:, 0][None, :, None, None]
    avg = jnp.mean(t, axis=(2, 3))                     # (B, Cout)
    mx = jnp.max(t, axis=(2, 3))                       # (B, Cout)

    def mlp(v):
        h = jnp.maximum(jnp.dot(v, w1.T, precision="highest"), 0.0)
        return jnp.dot(h, w2.T, precision="highest")

    att = jax.nn.sigmoid(mlp(avg) + mlp(mx))           # (B, Cout)
    return t * att[:, :, None, None]


if __name__ == "__main__":
    # Module config: CCM(infeature=8, out=8, redio=4).
    B, Cin, Cout, redio = 2, 8, 8, 4
    Chid = Cout // redio

    key = jax.random.PRNGKey(0)
    k_x, k_wd, k_bd, k_w1, k_w2, k_x2 = jax.random.split(key, 6)

    # Synthetic parameters in (squeezed) PyTorch conv-weight layouts.
    wd = 0.1 * jax.random.normal(k_wd, (Cout, Cin), dtype=jnp.float32)    # down.weight (Cout,Cin,1,1)
    bd = 0.1 * jax.random.normal(k_bd, (Cout, 1), dtype=jnp.float32)      # down.bias
    w1 = 0.1 * jax.random.normal(k_w1, (Chid, Cout), dtype=jnp.float32)   # fc1.weight (Chid,Cout,1,1)
    w2 = 0.1 * jax.random.normal(k_w2, (Cout, Chid), dtype=jnp.float32)   # fc2.weight (Cout,Chid,1,1)

    # Case 1: H*W already a multiple of 128 (16*16 = 256); bt=1 -> 2 grid steps.
    x = jax.random.normal(k_x, (B, Cin, 16, 16), dtype=jnp.float32)
    y = jax.block_until_ready(ccm_forward(x, wd, bd, w1, w2))
    y_ref = ccm_reference(x, wd, bd, w1, w2)
    assert y.shape == y_ref.shape
    assert jnp.allclose(y, y_ref, rtol=2e-3, atol=2e-3), "mismatch vs reference (unpadded HW)"

    # Case 2: H*W not a multiple of 128 (12*12 = 144 -> padded to 256 in the
    # wrapper; in-kernel pooling is masked to the true spatial extent).
    x2 = jax.random.normal(k_x2, (B, Cin, 12, 12), dtype=jnp.float32)
    y2 = jax.block_until_ready(ccm_forward(x2, wd, bd, w1, w2))
    y2_ref = ccm_reference(x2, wd, bd, w1, w2)
    assert jnp.allclose(y2, y2_ref, rtol=2e-3, atol=2e-3), "mismatch vs reference (padded HW)"

    print("KERNEL_OK")
</pallas_src>

<mosaic_0001>
module attributes {stable_mosaic.version = 11 : i64} {
  func.func @ccm_kernel(%arg0: i32, %arg1: memref<1x8x256xf32, #tpu.memory_space<vmem>>, %arg2: memref<8x8xf32, #tpu.memory_space<vmem>>, %arg3: memref<8x1xf32, #tpu.memory_space<vmem>>, %arg4: memref<2x8xf32, #tpu.memory_space<vmem>>, %arg5: memref<8x2xf32, #tpu.memory_space<vmem>>, %arg6: memref<1x8x256xf32, #tpu.memory_space<vmem>>, %arg7: memref<8x2xf32, #tpu.memory_space<vmem>>) attributes {dimension_semantics = [#tpu.dimension_semantics<parallel>], iteration_bounds = array<i64: 2>, scalar_prefetch = 0 : i64, scratch_operands = 1 : i64, tpu.core_type = #tpu.core_type<tc>, window_params = [{transform_indices = @transform_0, window_bounds = array<i64: 1, 8, 256>}, {pipeline_mode = #tpu.pipeline_mode<synchronous>, transform_indices = @transform_1, window_bounds = array<i64: 8, 8>}, {pipeline_mode = #tpu.pipeline_mode<synchronous>, transform_indices = @transform_2, window_bounds = array<i64: 8, 1>}, {pipeline_mode = #tpu.pipeline_mode<synchronous>, transform_indices = @transform_3, window_bounds = array<i64: 2, 8>}, {pipeline_mode = #tpu.pipeline_mode<synchronous>, transform_indices = @transform_4, window_bounds = array<i64: 8, 2>}, {transform_indices = @transform_5, window_bounds = array<i64: 1, 8, 256>}]} {
    %c0 = arith.constant 0 : index
    %c0_0 = arith.constant 0 : index
    %0 = vector.load %arg2[%c0, %c0_0] : memref<8x8xf32, #tpu.memory_space<vmem>>, vector<8x8xf32>
    %c0_1 = arith.constant 0 : index
    %c0_2 = arith.constant 0 : index
    %1 = vector.load %arg3[%c0_1, %c0_2] : memref<8x1xf32, #tpu.memory_space<vmem>>, vector<8x1xf32>
    %2 = vector.shape_cast %1 : vector<8x1xf32> to vector<8x1xf32>
    %3 = vector.broadcast %2 : vector<8x1xf32> to vector<8x256xf32>
    %c0_3 = arith.constant 0 : index
    %c0_4 = arith.constant 0 : index
    %c0_5 = arith.constant 0 : index
    %4 = vector.load %arg1[%c0_3, %c0_4, %c0_5] : memref<1x8x256xf32, #tpu.memory_space<vmem>>, vector<1x8x256xf32>
    %5 = vector.shape_cast %4 : vector<1x8x256xf32> to vector<8x256xf32>
    %cst = arith.constant dense<0.000000e+00> : vector<8x256xf32>
    %6 = tpu.matmul %0, %5, %cst {dimension_numbers = #tpu.dot_dimension_numbers<[1], [0], [0], [1], [0, 0, 1, 1], [], []>} : vector<8x8xf32>, vector<8x256xf32>, vector<8x256xf32> -> vector<8x256xf32>
    %7 = arith.addf %6, %3 : vector<8x256xf32>
    %c0_6 = arith.constant 0 : index
    %c0_7 = arith.constant 0 : index
    %c0_8 = arith.constant 0 : index
    %8 = vector.load %arg6[%c0_6, %c0_7, %c0_8] : memref<1x8x256xf32, #tpu.memory_space<vmem>>, vector<1x8x256xf32>
    %9 = vector.shape_cast %8 : vector<1x8x256xf32> to vector<8x256xf32>
    %10 = vector.shape_cast %7 : vector<8x256xf32> to vector<1x8x256xf32>
    tpu.vector_store %arg6[%c0_6, %c0_7, %c0_8], %10 {strides = array<i32>} : memref<1x8x256xf32, #tpu.memory_space<vmem>>, vector<1x8x256xf32>,
    %cst_9 = arith.constant dense<0.000000e+00> : vector<8xf32>
    %11 = vector.multi_reduction <add>, %7, %cst_9 [1] : vector<8x256xf32> to vector<8xf32>
    %12 = vector.shape_cast %11 : vector<8xf32> to vector<8x1xf32>
    %cst_10 = arith.constant dense<0xFF800000> : vector<8xf32>
    %13 = vector.multi_reduction <maximumf>, %7, %cst_10 [1] : vector<8x256xf32> to vector<8xf32>
    %14 = vector.shape_cast %13 : vector<8xf32> to vector<8x1xf32>
    %cst_11 = arith.constant 3.906250e-03 : f32
    %15 = vector.broadcast %cst_11 : f32 to vector<8x1xf32>
    %16 = arith.mulf %12, %15 : vector<8x1xf32>
    %c0_12 = arith.constant 0 : index
    %c0_13 = arith.constant 0 : index
    %17 = vector.load %arg7[%c0_12, %c0_13] : memref<8x2xf32, #tpu.memory_space<vmem>>, vector<8x1xf32>
    tpu.vector_store %arg7[%c0_12, %c0_13], %16 {strides = array<i32>} : memref<8x2xf32, #tpu.memory_space<vmem>>, vector<8x1xf32>,
    %c0_14 = arith.constant 0 : index
    %c1 = arith.constant 1 : index
    %18 = vector.load %arg7[%c0_14, %c1] : memref<8x2xf32, #tpu.memory_space<vmem>>, vector<8x1xf32>
    tpu.vector_store %arg7[%c0_14, %c1], %14 {strides = array<i32>} : memref<8x2xf32, #tpu.memory_space<vmem>>, vector<8x1xf32>,
    %c0_15 = arith.constant 0 : index
    %c0_16 = arith.constant 0 : index
    %19 = vector.load %arg4[%c0_15, %c0_16] : memref<2x8xf32, #tpu.memory_space<vmem>>, vector<2x8xf32>
    %c0_17 = arith.constant 0 : index
    %c0_18 = arith.constant 0 : index
    %20 = vector.load %arg7[%c0_17, %c0_18] : memref<8x2xf32, #tpu.memory_space<vmem>>, vector<8x2xf32>
    %cst_19 = arith.constant dense<0.000000e+00> : vector<2x2xf32>
    %21 = tpu.matmul %19, %20, %cst_19 {dimension_numbers = #tpu.dot_dimension_numbers<[1], [0], [0], [1], [0, 0, 1, 1], [], []>} : vector<2x8xf32>, vector<8x2xf32>, vector<2x2xf32> -> vector<2x2xf32>
    %cst_20 = arith.constant 0.000000e+00 : f32
    %22 = vector.broadcast %cst_20 : f32 to vector<2x2xf32>
    %23 = arith.maximumf %21, %22 : vector<2x2xf32>
    %c0_21 = arith.constant 0 : index
    %c0_22 = arith.constant 0 : index
    %24 = vector.load %arg5[%c0_21, %c0_22] : memref<8x2xf32, #tpu.memory_space<vmem>>, vector<8x2xf32>
    %cst_23 = arith.constant dense<0.000000e+00> : vector<8x2xf32>
    %25 = tpu.matmul %24, %23, %cst_23 {dimension_numbers = #tpu.dot_dimension_numbers<[1], [0], [0], [1], [0, 0, 1, 1], [], []>} : vector<8x2xf32>, vector<2x2xf32>, vector<8x2xf32> -> vector<8x2xf32>
    %26 = vector.extract_strided_slice %25 {offsets = [0, 0], sizes = [8, 1], strides = [1, 1]} : vector<8x2xf32> to vector<8x1xf32>
    %27 = vector.extract_strided_slice %25 {offsets = [0, 1], sizes = [8, 1], strides = [1, 1]} : vector<8x2xf32> to vector<8x1xf32>
    %28 = arith.addf %26, %27 : vector<8x1xf32>
    %29 = arith.negf %28 : vector<8x1xf32>
    %30 = math.exp %29 : vector<8x1xf32>
    %cst_24 = arith.constant 1.000000e+00 : f32
    %31 = vector.broadcast %cst_24 : f32 to vector<8x1xf32>
    %32 = arith.addf %31, %30 : vector<8x1xf32>
    %33 = arith.divf %31, %32 : vector<8x1xf32>
    %c0_25 = arith.constant 0 : index
    %c0_26 = arith.constant 0 : index
    %c0_27 = arith.constant 0 : index
    %34 = vector.load %arg6[%c0_25, %c0_26, %c0_27] : memref<1x8x256xf32, #tpu.memory_space<vmem>>, vector<1x8x256xf32>
    %35 = vector.shape_cast %34 : vector<1x8x256xf32> to vector<8x256xf32>
    %36 = vector.broadcast %33 : vector<8x1xf32> to vector<8x256xf32>
    %37 = arith.mulf %35, %36 : vector<8x256xf32>
    %c0_28 = arith.constant 0 : index
    %c0_29 = arith.constant 0 : index
    %c0_30 = arith.constant 0 : index
    %38 = vector.load %arg6[%c0_28, %c0_29, %c0_30] : memref<1x8x256xf32, #tpu.memory_space<vmem>>, vector<1x8x256xf32>
    %39 = vector.shape_cast %38 : vector<1x8x256xf32> to vector<8x256xf32>
    %40 = vector.shape_cast %37 : vector<8x256xf32> to vector<1x8x256xf32>
    tpu.vector_store %arg6[%c0_28, %c0_29, %c0_30], %40 {strides = array<i32>} : memref<1x8x256xf32, #tpu.memory_space<vmem>>, vector<1x8x256xf32>,
    return
  }
  func.func @transform_0(%arg0: i32) -> (i32, i32, i32) {
    %c0_i32 = arith.constant 0 : i32
    %c0_i32_0 = arith.constant 0 : i32
    %c0_i32_1 = arith.constant 0 : i32
    return %arg0, %c0_i32, %c0_i32_0 : i32, i32, i32
  }
  func.func @transform_1(%arg0: i32) -> (i32, i32) {
    %c0_i32 = arith.constant 0 : i32
    %c0_i32_0 = arith.constant 0 : i32
    %c0_i32_1 = arith.constant 0 : i32
    return %c0_i32, %c0_i32_0 : i32, i32
  }
  func.func @transform_2(%arg0: i32) -> (i32, i32) {
    %c0_i32 = arith.constant 0 : i32
    %c0_i32_0 = arith.constant 0 : i32
    %c0_i32_1 = arith.constant 0 : i32
    return %c0_i32, %c0_i32_0 : i32, i32
  }
  func.func @transform_3(%arg0: i32) -> (i32, i32) {
    %c0_i32 = arith.constant 0 : i32
    %c0_i32_0 = arith.constant 0 : i32
    %c0_i32_1 = arith.constant 0 : i32
    return %c0_i32, %c0_i32_0 : i32, i32
  }
  func.func @transform_4(%arg0: i32) -> (i32, i32) {
    %c0_i32 = arith.constant 0 : i32
    %c0_i32_0 = arith.constant 0 : i32
    %c0_i32_1 = arith.constant 0 : i32
    return %c0_i32, %c0_i32_0 : i32, i32
  }
  func.func @transform_5(%arg0: i32) -> (i32, i32, i32) {
    %c0_i32 = arith.constant 0 : i32
    %c0_i32_0 = arith.constant 0 : i32
    %c0_i32_1 = arith.constant 0 : i32
    return %arg0, %c0_i32, %c0_i32_0 : i32, i32, i32
  }
}

</mosaic_0001>

<llo_original>
// kernel: tpu_custom_call.1
$region0: #{tpu_custom_call.1}
  #allocation0 [shape = 'u32[]', space=smem, size = 0x4, offset = 0x4, fixed_abs, tag = 'smem constant byte address 0x4 - core index']
  #allocation1 [shape = 'u32[144,128]{1,0:T(1,128)}', space=vmem, size = 0x12000, scoped, tag = 'internal scratch']
  #allocation2 [shape = 'f32[8,2]{1,0:T(8,128)}', space=vmem, size = 0x1000, scoped, tag = 'scratch operand']
  %s0 = inlined_call_operand.hbm [shape: f32[2,8,256], index: 0, kind: input, shape index: {}]
  %s1 = inlined_call_operand.vmem [shape: f32[8,8], index: 1, kind: input, shape index: {}]
  %s2 = inlined_call_operand.vmem [shape: f32[8,1], index: 2, kind: input, shape index: {}]
  %s3 = inlined_call_operand.vmem [shape: f32[2,8], index: 3, kind: input, shape index: {}]
  %s4 = inlined_call_operand.vmem [shape: f32[8,2], index: 4, kind: input, shape index: {}]
  %s5 = inlined_call_operand.hbm [shape: f32[2,8,256], index: 5, kind: output, shape index: {}]
  %s6 = sld [smem:[#allocation0]]
  $region57: #{tpu_custom_call.1} parent=0
    _
  %s8 = ssub.s32 1, %s6
  %s9 = scalar_select 0, %s8, %s6
  $region1: #{tpu_custom_call.1} parent=0
    #allocation3 [shape = 'u8[16384]{0}', space=vmem, size = 0x4000, scoped, tag = 'input window, operand 0']
    #allocation4 [shape = 's32[2]{0}', space=sflag, size = 0x8, scoped, tag = 'scoped memory for tpu_custom_call.1']
    #allocation5 [shape = 's32[2]{0}', space=sflag, size = 0x8, scoped, tag = 'scoped memory for tpu_custom_call.1']
    #allocation6 [shape = 'u8[16384]{0}', space=vmem, size = 0x4000, scoped, tag = 'output window, operand 0']
    %10 = vsyncpa [#allocation4], 0
    %s11 = scalar_lea.sflag [#allocation4], 1
    %12 = vsyncpa %s11, 0
    %13 = vsyncpa [#allocation5], 0
    %s14 = scalar_lea.sflag [#allocation5], 1
    %15 = vsyncpa %s14, 0
    loop: start=0, step=1, limit=4
    $region2: #{tpu_custom_call.1} parent=1 // loop_pre_header
      _
    $region3: #{tpu_custom_call.1} parent=1 // loop_header
      %s17 = sphi 0, %s21
      %p18 = scmp.ge.s32.totalorder %s17, 4
      %s27 = sphi 0, %s29
      %s30 = sphi 0, %s27
      %s31 = sphi 0, %s30
      %s47 = sphi 0, %s31
      %s51 = sphi 0, %s51
      %s53 = sphi 0, %s51
      %s54 = sphi 0, %s53
      %s68 = sphi 0, %s54
      %s72 = sphi 0, %s72
      %s74 = sphi 0, %s72
      %s75 = sphi 0, %s74
      %s89 = sphi 0, %s75
      %s93 = sphi 0, %s93
      %s95 = sphi 0, %s93
      %s96 = sphi 0, %s95
      %s110 = sphi 0, %s96
      %s114 = sphi 0, %s114
      %s116 = sphi 0, %s114
      %s117 = sphi 0, %s116
      %s131 = sphi 0, %s117
      %s137 = sphi 0, %s139
      %s140 = sphi 0, %s137
      %s141 = sphi 0, %s140
      %s157 = sphi 0, %s141
    $region4: #{tpu_custom_call.1} parent=1 // loop_header_branch
      %20 = sbr.rel (%p18) target = $region8
    $region5: #{tpu_custom_call.1} parent=1 // loop_body
      %s22 = ssub.s32 %s17, 1
      %s23 = ssub.s32 %s17, 2
      %s24 = sadd.s32 %s17, 1
      %s25 = ssub.s32 %s17, %s24
      %p26 = scmp.eq.s32.totalorder %s25, 0
      %s28 = sadd.s32 %s27, 1
      %s29 = scalar_select %p26, %s27, %s28
      %p32 = pneg %p26
      %p33 = scmp.eq.s32.totalorder %s17, 1
      %p34 = por %p32, %p33
      %p35 = scmp.ne.s32.totalorder %s27, %s30
      %p36 = scmp.eq.s32.totalorder %s17, 0
      %p37 = por %p35, %p36
      %p38 = scmp.ne.s32.totalorder %s27, %s30
      %p39 = scmp.eq.s32.totalorder %s22, 1
      %p40 = por %p38, %p39
      %p41 = scmp.ne.s32.totalorder %s30, %s31
      %p42 = scmp.eq.s32.totalorder %s22, 0
      %p43 = por %p41, %p42
      %p44 = scmp.ne.s32.totalorder %s30, %s31
      %p45 = scmp.eq.s32.totalorder %s23, 1
      %p46 = por %p44, %p45
      %p48 = scmp.ne.s32.totalorder %s31, %s47
      %p49 = scmp.eq.s32.totalorder %s23, 0
      %p50 = por %p48, %p49
      %s52 = sadd.s32 %s51, 1
      %p55 = scmp.eq.s32.totalorder %s17, 1
      %p56 = scmp.ne.s32.totalorder %s51, %s53
      %p57 = scmp.eq.s32.totalorder %s17, 0
      %p58 = por %p56, %p57
      %p59 = scmp.ne.s32.totalorder %s51, %s53
      %p60 = scmp.eq.s32.totalorder %s22, 1
      %p61 = por %p59, %p60
      %p62 = scmp.ne.s32.totalorder %s53, %s54
      %p63 = scmp.eq.s32.totalorder %s22, 0
      %p64 = por %p62, %p63
      %p65 = scmp.ne.s32.totalorder %s53, %s54
      %p66 = scmp.eq.s32.totalorder %s23, 1
      %p67 = por %p65, %p66
      %p69 = scmp.ne.s32.totalorder %s54, %s68
      %p70 = scmp.eq.s32.totalorder %s23, 0
      %p71 = por %p69, %p70
      %s73 = sadd.s32 %s72, 1
      %p76 = scmp.eq.s32.totalorder %s17, 1
      %p77 = scmp.ne.s32.totalorder %s72, %s74
      %p78 = scmp.eq.s32.totalorder %s17, 0
      %p79 = por %p77, %p78
      %p80 = scmp.ne.s32.totalorder %s72, %s74
      %p81 = scmp.eq.s32.totalorder %s22, 1
      %p82 = por %p80, %p81
      %p83 = scmp.ne.s32.totalorder %s74, %s75
      %p84 = scmp.eq.s32.totalorder %s22, 0
      %p85 = por %p83, %p84
      %p86 = scmp.ne.s32.totalorder %s74, %s75
      %p87 = scmp.eq.s32.totalorder %s23, 1
      %p88 = por %p86, %p87
      %p90 = scmp.ne.s32.totalorder %s75, %s89
      %p91 = scmp.eq.s32.totalorder %s23, 0
      %p92 = por %p90, %p91
      %s94 = sadd.s32 %s93, 1
      %p97 = scmp.eq.s32.totalorder %s17, 1
      %p98 = scmp.ne.s32.totalorder %s93, %s95
      %p99 = scmp.eq.s32.totalorder %s17, 0
      %p100 = por %p98, %p99
      %p101 = scmp.ne.s32.totalorder %s93, %s95
      %p102 = scmp.eq.s32.totalorder %s22, 1
      %p103 = por %p101, %p102
      %p104 = scmp.ne.s32.totalorder %s95, %s96
      %p105 = scmp.eq.s32.totalorder %s22, 0
      %p106 = por %p104, %p105
      %p107 = scmp.ne.s32.totalorder %s95, %s96
      %p108 = scmp.eq.s32.totalorder %s23, 1
      %p109 = por %p107, %p108
      %p111 = scmp.ne.s32.totalorder %s96, %s110
      %p112 = scmp.eq.s32.totalorder %s23, 0
      %p113 = por %p111, %p112
      %s115 = sadd.s32 %s114, 1
      %p118 = scmp.eq.s32.totalorder %s17, 1
      %p119 = scmp.ne.s32.totalorder %s114, %s116
      %p120 = scmp.eq.s32.totalorder %s17, 0
      %p121 = por %p119, %p120
      %p122 = scmp.ne.s32.totalorder %s114, %s116
      %p123 = scmp.eq.s32.totalorder %s22, 1
      %p124 = por %p122, %p123
      %p125 = scmp.ne.s32.totalorder %s116, %s117
      %p126 = scmp.eq.s32.totalorder %s22, 0
      %p127 = por %p125, %p126
      %p128 = scmp.ne.s32.totalorder %s116, %s117
      %p129 = scmp.eq.s32.totalorder %s23, 1
      %p130 = por %p128, %p129
      %p132 = scmp.ne.s32.totalorder %s117, %s131
      %p133 = scmp.eq.s32.totalorder %s23, 0
      %p134 = por %p132, %p133
      %s135 = ssub.s32 %s17, %s24
      %p136 = scmp.eq.s32.totalorder %s135, 0
      %s138 = sadd.s32 %s137, 1
      %s139 = scalar_select %p136, %s137, %s138
      %p142 = pneg %p136
      %p143 = scmp.eq.s32.totalorder %s17, 1
      %p144 = por %p142, %p143
      %p145 = scmp.ne.s32.totalorder %s137, %s140
      %p146 = scmp.eq.s32.totalorder %s17, 0
      %p147 = por %p145, %p146
      %p148 = scmp.ne.s32.totalorder %s137, %s140
      %p149 = scmp.eq.s32.totalorder %s22, 1
      %p150 = por %p148, %p149
      %p151 = scmp.ne.s32.totalorder %s140, %s141
      %p152 = scmp.eq.s32.totalorder %s22, 0
      %p153 = por %p151, %p152
      %p154 = scmp.ne.s32.totalorder %s140, %s141
      %p155 = scmp.eq.s32.totalorder %s23, 1
      %p156 = por %p154, %p155
      %p158 = scmp.ne.s32.totalorder %s141, %s157
      %p159 = scmp.eq.s32.totalorder %s23, 0
      %p160 = por %p158, %p159
      %p161 = scmp.le.s32.totalorder 1, %s17
      %p162 = scmp.lt.s32.totalorder %s17, 3
      %p163 = pnand %p161, %p162
      %p164 = pneg %p163
      // Predicated region
      $region9: #{tpu_custom_call.1} parent=5 // pred_check
        _
      $region10: #{tpu_custom_call.1} parent=5 // pred_check_branch
        %166 = sbr.rel (%p163) target = $region12
      $region11: #{tpu_custom_call.1} parent=5 // pred_region
        %s167 = ssub.s32 %s17, 1
        // Predicated region
        $region13: #{tpu_custom_call.1} parent=11 // pred_check
          %p168 = pneg %p64
        $region14: #{tpu_custom_call.1} parent=11 // pred_check_branch
          %170 = sbr.rel (%p168) target = $region16
        $region15: #{tpu_custom_call.1} parent=11 // pred_region
          _
        $region16: #{tpu_custom_call.1} parent=11 // pred_fallthru
          _
        // Predicated region
        $region17: #{tpu_custom_call.1} parent=11 // pred_check
          %p171 = pneg %p85
        $region18: #{tpu_custom_call.1} parent=11 // pred_check_branch
          %173 = sbr.rel (%p171) target = $region20
        $region19: #{tpu_custom_call.1} parent=11 // pred_region
          _
        $region20: #{tpu_custom_call.1} parent=11 // pred_fallthru
          _
        // Predicated region
        $region21: #{tpu_custom_call.1} parent=11 // pred_check
          %p174 = pneg %p106
        $region22: #{tpu_custom_call.1} parent=11 // pred_check_branch
          %176 = sbr.rel (%p174) target = $region24
        $region23: #{tpu_custom_call.1} parent=11 // pred_region
          _
        $region24: #{tpu_custom_call.1} parent=11 // pred_fallthru
          _
        // Predicated region
        $region25: #{tpu_custom_call.1} parent=11 // pred_check
          %p177 = pneg %p127
        $region26: #{tpu_custom_call.1} parent=11 // pred_check_branch
          %179 = sbr.rel (%p177) target = $region28
        $region27: #{tpu_custom_call.1} parent=11 // pred_region
          _
        $region28: #{tpu_custom_call.1} parent=11 // pred_fallthru
          _
      $region12: #{tpu_custom_call.1} parent=5 // pred_fallthru
        _
      %p180 = scmp.lt.s32.totalorder %s17, 2
      // Predicated region
      $region29: #{tpu_custom_call.1} parent=5 // pred_check
        %p181 = pneg %p180
      $region30: #{tpu_custom_call.1} parent=5 // pred_check_branch
        %183 = sbr.rel (%p181) target = $region32
      $region31: #{tpu_custom_call.1} parent=5 // pred_region
        // Predicated region
        $region33: #{tpu_custom_call.1} parent=31 // pred_check
          %p184 = pneg %p37
        $region34: #{tpu_custom_call.1} parent=31 // pred_check_branch
          %186 = sbr.rel (%p184) target = $region36
        $region35: #{tpu_custom_call.1} parent=31 // pred_region
          %s187 = sand.u32 %s27, 1
          %s188 = scalar_lea.sflag [#allocation4], %s187
          %s189 = sand.u32 %s27, 1
          %s190 = smul.addr %s189, 16
          %s191 = scalar_lea.vmem [#allocation3], %s190
          %s193 = ssub.s32 256, 256
          %194 = vsyncadd %s188, %s193
          %s195 = smul.addr %s17, 2
          %s196 = smul.addr %s195, 128
          %s197 = scalar_lea.hbm %s0, %s196
          %s199 = sshll.u32 %s191, 4
          %s200 = int_to_ptr.vmem [resolvable:$true] %s199
          %202 = dma.hbm_to_vmem [thread:$0]  %s197, 256, %s200, %s188
        $region36: #{tpu_custom_call.1} parent=31 // pred_fallthru
          _
      $region32: #{tpu_custom_call.1} parent=5 // pred_fallthru
        _
      %p203 = scmp.le.s32.totalorder 1, %s17
      %p204 = scmp.lt.s32.totalorder %s17, 3
      %p205 = pnand %p203, %p204
      %p206 = pneg %p205
      // Predicated region
      $region37: #{tpu_custom_call.1} parent=5 // pred_check
        _
      $region38: #{tpu_custom_call.1} parent=5 // pred_check_branch
        %208 = sbr.rel (%p205) target = $region40
      $region39: #{tpu_custom_call.1} parent=5 // pred_region
        %s209 = ssub.s32 %s17, 1
        %s210 = sand.u32 %s30, 1
        %s211 = scalar_lea.sflag [#allocation4], %s210
        %s212 = sand.u32 %s30, 1
        %s213 = smul.addr %s212, 16
        %s214 = scalar_lea.vmem [#allocation3], %s213
        // Predicated region
        $region41: #{tpu_custom_call.1} parent=39 // pred_check
          %p215 = pneg %p43
        $region42: #{tpu_custom_call.1} parent=39 // pred_check_branch
          %217 = sbr.rel (%p215) target = $region44
        $region43: #{tpu_custom_call.1} parent=39 // pred_region
          %218 = dma.done %s211, 256
        $region44: #{tpu_custom_call.1} parent=39 // pred_fallthru
          _
        %s219 = sand.u32 %s30, 1
        %s220 = scalar_lea.sflag [#allocation4], %s219
        %s221 = sand.u32 %s30, 1
        %s222 = smul.addr %s221, 16
        %s223 = scalar_lea.vmem [#allocation3], %s222
        %p224 = pneg %p43
        %p225 = pneg %p40
        %p226 = pneg %p64
        %p227 = pneg %p61
        %p228 = pneg %p85
        %p229 = pneg %p82
        %p230 = pneg %p106
        %p231 = pneg %p103
        %p232 = pneg %p127
        %p233 = pneg %p124
        %p234 = pneg %p153
        %p235 = pneg %p150
        %s236 = sand.u32 %s140, 1
        %s237 = scalar_lea.sflag [#allocation5], %s236
        %s238 = sand.u32 %s140, 1
        %s239 = smul.addr %s238, 16
        %s240 = scalar_lea.vmem [#allocation6], %s239
        %v241 = vld [vmem:[%s1] sm:$0xff]
        %v242 = vld [vmem:[%s2] sm:$0xff]
        %244 = vset.pattern.permute.xlu0 0
        %245 = vperm.xlu0 %244, %v242
        %v246 = vpop.permute.xlu0 %245
        %v248 = vld [vmem:[%s214] sm:$0xff]
        %v249 = vld [vmem:[%s214 + $0x8] sm:$0xff]
        %vm250 = vcmask 64512
        %v252 = vsel %vm250, %v241, 0
        %254 = vmatprep.subr.mxu0 %v249
        %255 = vmatpush1.msra.mxu0 %v248
        %256 = vmatprep.subr.mxu0 0.0
        %257 = vmatpush1.msra.mxu0 0.0
        %258 = vmatprep.subr.mxu0 0.0
        %259 = vmatpush1.msra.mxu0 0.0
        %260 = vmatprep.subr.mxu0 0.0
        %261 = vmatpush1.msra.mxu0 0.0
        %262 = vmatprep.subr.mxu0 0.0
        %263 = vmatpush1.msra.mxu0 0.0
        %264 = vmatprep.subr.mxu0 0.0
        %265 = vmatpush1.msra.mxu0 0.0
        %266 = vmatprep.subr.mxu0 0.0
        %267 = vmatpush1.msra.mxu0 0.0
        %268 = vmatprep.subr.mxu0 0.0
        %269 = vmatpush1.msra.mxu0 0.0
        %270 = vmatprep.subr.mxu0 0.0
        %271 = vmatpush1.msra.mxu0 0.0
        %272 = vmatprep.subr.mxu0 0.0
        %273 = vmatpush1.msra.mxu0 0.0
        %274 = vmatprep.subr.mxu0 0.0
        %275 = vmatpush1.msra.mxu0 0.0
        %276 = vmatprep.subr.mxu0 0.0
        %277 = vmatpush1.msra.mxu0 0.0
        %278 = vmatprep.subr.mxu0 0.0
        %279 = vmatpush1.msra.mxu0 0.0
        %280 = vmatprep.subr.mxu0 0.0
        %281 = vmatpush1.msra.mxu0 0.0
        %282 = vmatprep.subr.mxu0 0.0
        %283 = vmatpush1.msra.mxu0 0.0
        %284 = vmatprep.subr.mxu0 0.0
        %285 = vmatpush1.msra.mxu0 0.0
        %286 = vmatprep.subr.mxu0 0.0
        %287 = vmatpush1.msra.mxu0 0.0
        %288 = vmatprep.subr.mxu0 0.0
        %289 = vmatpush1.msra.mxu0 0.0
        %290 = vmatprep.subr.mxu0 0.0
        %291 = vmatpush1.msra.mxu0 0.0
        %292 = vmatprep.subr.mxu0 0.0
        %293 = vmatpush1.msra.mxu0 0.0
        %294 = vmatprep.subr.mxu0 0.0
        %295 = vmatpush1.msra.mxu0 0.0
        %296 = vmatprep.subr.mxu0 0.0
        %297 = vmatpush1.msra.mxu0 0.0
        %298 = vmatprep.subr.mxu0 0.0
        %299 = vmatpush1.msra.mxu0 0.0
        %300 = vmatprep.subr.mxu0 0.0
        %301 = vmatpush1.msra.mxu0 0.0
        %302 = vmatprep.subr.mxu0 0.0
        %303 = vmatpush1.msra.mxu0 0.0
        %304 = vmatprep.subr.mxu0 0.0
        %305 = vmatpush1.msra.mxu0 0.0
        %306 = vmatprep.subr.mxu0 0.0
        %307 = vmatpush1.msra.mxu0 0.0
        %308 = vmatprep.subr.mxu0 0.0
        %309 = vmatpush1.msra.mxu0 0.0
        %310 = vmatprep.subr.mxu0 0.0
        %311 = vmatpush1.msra.mxu0 0.0
        %312 = vmatprep.subr.mxu0 0.0
        %313 = vmatpush1.msra.mxu0 0.0
        %314 = vmatprep.subr.mxu0 0.0
        %315 = vmatpush1.msra.mxu0 0.0
        %316 = vmatprep.subr.mxu0 0.0
        %317 = vmatpush1.msra.mxu0 0.0
        %318 = vmatprep.mubr.f32.mxu0 0.0
        %319 = vmatmul.mubr.f32.gmra.mrb[0].mxu0 %v252
        %v320 = vpop.f32.mrb[0].mxu0
        %v321 = vadd.f32 %v246, %v320
        %v322 = vpop.f32.mrb[0].mxu0
        %v323 = vadd.f32 %v246, %v322
        %324 = vdwg.mxu0
        %325 = vst [vmem:[%s240] sm:$0xff] %v321
        %326 = vst [vmem:[%s240 + $0x8] sm:$0xff] %v323
        %v327 = vadd.f32 %v321, %v323
        %328 = vadd.xlane.f32.xlu0 %v327
        %v329 = vpop.xlane.xlu0 %328
        %v330 = vmax.f32 %v321, %v323
        %331 = vmax.xlane.f32.xlu0 %v330
        %v332 = vpop.xlane.xlu0 %331
        %v333 = vmul.f32 %v329, 0.00390625
        %vm334 = vcmask 7168
        %335 = vst.msk [vmem:[#allocation2] sm:$0xff] %vm334, %v333
        %vm336 = vcmask 15368
        %337 = vst.msk [vmem:[#allocation2] sm:$0xff] %vm336, %v332
        %v338 = vld [vmem:[%s3] sm:$0x3]
        %v339 = vld [vmem:[#allocation2] sm:$0xff]
        %v341 = vsel %vm250, %v338, 0
        %343 = vmatprep.subr.mxu0 0.0
        %344 = vmatpush1.msra.mxu0 %v339
        %345 = vmatprep.subr.mxu0 0.0
        %346 = vmatpush1.msra.mxu0 0.0
        %347 = vmatprep.subr.mxu0 0.0
        %348 = vmatpush1.msra.mxu0 0.0
        %349 = vmatprep.subr.mxu0 0.0
        %350 = vmatpush1.msra.mxu0 0.0
        %351 = vmatprep.subr.mxu0 0.0
        %352 = vmatpush1.msra.mxu0 0.0
        %353 = vmatprep.subr.mxu0 0.0
        %354 = vmatpush1.msra.mxu0 0.0
        %355 = vmatprep.subr.mxu0 0.0
        %356 = vmatpush1.msra.mxu0 0.0
        %357 = vmatprep.subr.mxu0 0.0
        %358 = vmatpush1.msra.mxu0 0.0
        %359 = vmatprep.subr.mxu0 0.0
        %360 = vmatpush1.msra.mxu0 0.0
        %361 = vmatprep.subr.mxu0 0.0
        %362 = vmatpush1.msra.mxu0 0.0
        %363 = vmatprep.subr.mxu0 0.0
        %364 = vmatpush1.msra.mxu0 0.0
        %365 = vmatprep.subr.mxu0 0.0
        %366 = vmatpush1.msra.mxu0 0.0
        %367 = vmatprep.subr.mxu0 0.0
        %368 = vmatpush1.msra.mxu0 0.0
        %369 = vmatprep.subr.mxu0 0.0
        %370 = vmatpush1.msra.mxu0 0.0
        %371 = vmatprep.subr.mxu0 0.0
        %372 = vmatpush1.msra.mxu0 0.0
        %373 = vmatprep.subr.mxu0 0.0
        %374 = vmatpush1.msra.mxu0 0.0
        %375 = vmatprep.subr.mxu0 0.0
        %376 = vmatpush1.msra.mxu0 0.0
        %377 = vmatprep.subr.mxu0 0.0
        %378 = vmatpush1.msra.mxu0 0.0
        %379 = vmatprep.subr.mxu0 0.0
        %380 = vmatpush1.msra.mxu0 0.0
        %381 = vmatprep.subr.mxu0 0.0
        %382 = vmatpush1.msra.mxu0 0.0
        %383 = vmatprep.subr.mxu0 0.0
        %384 = vmatpush1.msra.mxu0 0.0
        %385 = vmatprep.subr.mxu0 0.0
        %386 = vmatpush1.msra.mxu0 0.0
        %387 = vmatprep.subr.mxu0 0.0
        %388 = vmatpush1.msra.mxu0 0.0
        %389 = vmatprep.subr.mxu0 0.0
        %390 = vmatpush1.msra.mxu0 0.0
        %391 = vmatprep.subr.mxu0 0.0
        %392 = vmatpush1.msra.mxu0 0.0
        %393 = vmatprep.subr.mxu0 0.0
        %394 = vmatpush1.msra.mxu0 0.0
        %395 = vmatprep.subr.mxu0 0.0
        %396 = vmatpush1.msra.mxu0 0.0
        %397 = vmatprep.subr.mxu0 0.0
        %398 = vmatpush1.msra.mxu0 0.0
        %399 = vmatprep.subr.mxu0 0.0
        %400 = vmatpush1.msra.mxu0 0.0
        %401 = vmatprep.subr.mxu0 0.0
        %402 = vmatpush1.msra.mxu0 0.0
        %403 = vmatprep.subr.mxu0 0.0
        %404 = vmatpush1.msra.mxu0 0.0
        %405 = vmatprep.subr.mxu0 0.0
        %406 = vmatpush1.msra.mxu0 0.0
        %407 = vmatprep.mubr.f32.mxu0 0.0
        %408 = vmatmul.mubr.f32.gmra.mrb[0].mxu0 %v341
        %v409 = vpop.f32.mrb[0].mxu0
        %v410 = vadd.f32 0.0, %v409
        %v411 = vpop.f32.mrb[0].mxu0
        %412 = vdwg.mxu0
        %v413 = vmax.f32 %v410, 0.0
        %v414 = vld [vmem:[%s4] sm:$0xff]
        %vm415 = vcmask 15360
        %v417 = vsel %vm415, %v414, 0
        %vm419 = vcmask 1041408
        %v421 = vsel %vm419, %v413, 0
        %423 = vmatprep.subr.mxu0 0.0
        %424 = vmatpush1.msra.mxu0 %v421
        %425 = vmatprep.subr.mxu0 0.0
        %426 = vmatpush1.msra.mxu0 0.0
        %427 = vmatprep.subr.mxu0 0.0
        %428 = vmatpush1.msra.mxu0 0.0
        %429 = vmatprep.subr.mxu0 0.0
        %430 = vmatpush1.msra.mxu0 0.0
        %431 = vmatprep.subr.mxu0 0.0
        %432 = vmatpush1.msra.mxu0 0.0
        %433 = vmatprep.subr.mxu0 0.0
        %434 = vmatpush1.msra.mxu0 0.0
        %435 = vmatprep.subr.mxu0 0.0
        %436 = vmatpush1.msra.mxu0 0.0
        %437 = vmatprep.subr.mxu0 0.0
        %438 = vmatpush1.msra.mxu0 0.0
        %439 = vmatprep.subr.mxu0 0.0
        %440 = vmatpush1.msra.mxu0 0.0
        %441 = vmatprep.subr.mxu0 0.0
        %442 = vmatpush1.msra.mxu0 0.0
        %443 = vmatprep.subr.mxu0 0.0
        %444 = vmatpush1.msra.mxu0 0.0
        %445 = vmatprep.subr.mxu0 0.0
        %446 = vmatpush1.msra.mxu0 0.0
        %447 = vmatprep.subr.mxu0 0.0
        %448 = vmatpush1.msra.mxu0 0.0
        %449 = vmatprep.subr.mxu0 0.0
        %450 = vmatpush1.msra.mxu0 0.0
        %451 = vmatprep.subr.mxu0 0.0
        %452 = vmatpush1.msra.mxu0 0.0
        %453 = vmatprep.subr.mxu0 0.0
        %454 = vmatpush1.msra.mxu0 0.0
        %455 = vmatprep.subr.mxu0 0.0
        %456 = vmatpush1.msra.mxu0 0.0
        %457 = vmatprep.subr.mxu0 0.0
        %458 = vmatpush1.msra.mxu0 0.0
        %459 = vmatprep.subr.mxu0 0.0
        %460 = vmatpush1.msra.mxu0 0.0
        %461 = vmatprep.subr.mxu0 0.0
        %462 = vmatpush1.msra.mxu0 0.0
        %463 = vmatprep.subr.mxu0 0.0
        %464 = vmatpush1.msra.mxu0 0.0
        %465 = vmatprep.subr.mxu0 0.0
        %466 = vmatpush1.msra.mxu0 0.0
        %467 = vmatprep.subr.mxu0 0.0
        %468 = vmatpush1.msra.mxu0 0.0
        %469 = vmatprep.subr.mxu0 0.0
        %470 = vmatpush1.msra.mxu0 0.0
        %471 = vmatprep.subr.mxu0 0.0
        %472 = vmatpush1.msra.mxu0 0.0
        %473 = vmatprep.subr.mxu0 0.0
        %474 = vmatpush1.msra.mxu0 0.0
        %475 = vmatprep.subr.mxu0 0.0
        %476 = vmatpush1.msra.mxu0 0.0
        %477 = vmatprep.subr.mxu0 0.0
        %478 = vmatpush1.msra.mxu0 0.0
        %479 = vmatprep.subr.mxu0 0.0
        %480 = vmatpush1.msra.mxu0 0.0
        %481 = vmatprep.subr.mxu0 0.0
        %482 = vmatpush1.msra.mxu0 0.0
        %483 = vmatprep.subr.mxu0 0.0
        %484 = vmatpush1.msra.mxu0 0.0
        %485 = vmatprep.subr.mxu0 0.0
        %486 = vmatpush1.msra.mxu0 0.0
        %487 = vmatprep.mubr.f32.mxu0 0.0
        %488 = vmatmul.mubr.f32.gmra.mrb[0].mxu0 %v417
        %v489 = vpop.f32.mrb[0].mxu0
        %v490 = vadd.f32 0.0, %v489
        %v491 = vpop.f32.mrb[0].mxu0
        %492 = vdwg.mxu0
        %494 = vrot.lane.b32.xlu0 %v490, 127
        %v495 = vpop.permute.xlu0 %494
        %v497 = vadd.f32 %v490, %v495
        %v498 = vxor.u32 %v497, 2147483648
        %v499 = vmul.f32 %v498, 1.442695
        %v500 = vpow.pop %v499
        %v501 = vadd.f32 %v500, 1.0
        %v502 = vrcp.pop %v501
        %v503 = vmul.f32 1.0, %v502
        %v504 = vld [vmem:[%s240] sm:$0xff]
        %v505 = vld [vmem:[%s240 + $0x8] sm:$0xff]
        %507 = vset.pattern.permute.xlu0 0
        %508 = vperm.xlu0 %507, %v503
        %v509 = vpop.permute.xlu0 %508
        %v511 = vmul.f32 %v504, %v509
        %v512 = vmul.f32 %v505, %v509
        %513 = vst [vmem:[%s240] sm:$0xff] %v511
        %514 = vst [vmem:[%s240 + $0x8] sm:$0xff] %v512
        %s515 = sand.u32 %s140, 1
        %s516 = scalar_lea.sflag [#allocation5], %s515
        %s517 = sand.u32 %s140, 1
        %s518 = smul.addr %s517, 16
        %s519 = scalar_lea.vmem [#allocation6], %s518
        // Predicated region
        $region45: #{tpu_custom_call.1} parent=39 // pred_check
          %p520 = pneg %p150
        $region46: #{tpu_custom_call.1} parent=39 // pred_check_branch
          %522 = sbr.rel (%p520) target = $region48
        $region47: #{tpu_custom_call.1} parent=39 // pred_region
          %s524 = ssub.s32 256, 256
          %525 = vsyncadd %s516, %s524
          %s526 = smul.addr %s22, 2
          %s527 = smul.addr %s526, 128
          %s528 = scalar_lea.hbm %s5, %s527
          %s530 = sshll.u32 %s519, 4
          %s531 = int_to_ptr.vmem [resolvable:$true] %s530
          %533 = dma.vmem_to_hbm [thread:$0]  %s531, 256, %s528, %s516
        $region48: #{tpu_custom_call.1} parent=39 // pred_fallthru
          _
      $region40: #{tpu_custom_call.1} parent=5 // pred_fallthru
        _
      %p534 = scmp.le.s32.totalorder 2, %s17
      // Predicated region
      $region49: #{tpu_custom_call.1} parent=5 // pred_check
        %p535 = pneg %p534
      $region50: #{tpu_custom_call.1} parent=5 // pred_check_branch
        %537 = sbr.rel (%p535) target = $region52
      $region51: #{tpu_custom_call.1} parent=5 // pred_region
        %s538 = ssub.s32 %s17, 2
        // Predicated region
        $region53: #{tpu_custom_call.1} parent=51 // pred_check
          %p539 = pneg %p156
        $region54: #{tpu_custom_call.1} parent=51 // pred_check_branch
          %541 = sbr.rel (%p539) target = $region56
        $region55: #{tpu_custom_call.1} parent=51 // pred_region
          %s542 = sand.u32 %s141, 1
          %s543 = scalar_lea.sflag [#allocation5], %s542
          %s544 = sand.u32 %s141, 1
          %s545 = smul.addr %s544, 16
          %s546 = scalar_lea.vmem [#allocation6], %s545
          %547 = dma.done %s543, 256
        $region56: #{tpu_custom_call.1} parent=51 // pred_fallthru
          _
      $region52: #{tpu_custom_call.1} parent=5 // pred_fallthru
        _
    $region6: #{tpu_custom_call.1} parent=1 // loop_footer
      %s21 = sadd.s32 1, %s17
    $region7: #{tpu_custom_call.1} parent=1 // loop_footer_branch
      %16 = sbr.rel target = $region3
    $region8: #{tpu_custom_call.1} parent=1 // loop_exit
      _
    %548 = vsyncpa [#allocation4], 1
    %s549 = scalar_lea.sflag [#allocation4], 1
    %550 = vsyncpa %s549, 1
    %551 = vsyncpa [#allocation5], 1
    %s552 = scalar_lea.sflag [#allocation5], 1
    %553 = vsyncpa %s552, 1

</llo_original>
